<compile_context>
chip_gen: v7x
topology: tpu7x:2x2x1
jax: 0.10.0
libtpu: 0.0.40
codegen_flags: <defaults>
</compile_context>

<pallas_src>
import functools

import jax
import jax.numpy as jnp
import numpy as np
from jax.experimental import pallas as pl
from jax.experimental.pallas import tpu as pltpu

_LANE = 128


def _residual_block_kernel(x_ref, halo_ref, w_ref, b_ref, o_ref, *, pad_left):
    """One (batch, time-tile) grid step.

    x_ref   : (C, TT)    main time tile of the (left-)padded input
    halo_ref: (C, K-1)   first K-1 columns of the next tile (right halo)
    w_ref   : (K, C, C)  folded weights: bn_scale * pointwise * depthwise_k
    b_ref   : (C, 1)     folded BatchNorm shift
    o_ref   : (C, TT)    output tile: x + relu(bn(conv(x)))
    """
    tt = x_ref.shape[-1]
    k_taps = w_ref.shape[0]

    # Receptive-field window for this output tile: TT + K - 1 columns.
    win = jnp.concatenate([x_ref[...], halo_ref[...]], axis=-1)

    # Depthwise + pointwise + BN-scale folded into K MXU matmuls over shifted
    # windows (K is small & static, e.g. 3), accumulated in f32.
    acc = jnp.dot(w_ref[0], win[:, 0:tt], preferred_element_type=jnp.float32)
    for k in range(1, k_taps):
        acc = acc + jnp.dot(w_ref[k], win[:, k:k + tt],
                            preferred_element_type=jnp.float32)

    acc = acc + b_ref[...]              # folded BN shift (broadcast over lanes)
    acc = jnp.maximum(acc, 0.0)         # ReLU
    # TODO(synk): dropout is identity in eval mode; train-mode dropout would
    # use pltpu.prng_seed / pltpu.prng_random_bits here.

    res = win[:, pad_left:pad_left + tt].astype(jnp.float32)  # original x tile
    o_ref[...] = (res + acc).astype(o_ref.dtype)


def residual_block_forward(x, dw_weight, pw_weight, gamma, beta,
                           running_mean, running_var, *,
                           padding=1, eps=1e-5, time_tile=None):
    """Eval-mode ResidualBlock forward.  x: (B, C, T) -> (B, C, T)."""
    B, C, T = x.shape
    C_out, C_in = pw_weight.shape
    K = dw_weight.shape[-1]
    assert C_in == C and C_out == C, "residual add requires matching channels"
    assert K >= 2, "kernel_size >= 2 expected"
    T_out = T + 2 * padding - K + 1                       # stride = 1
    assert T_out == T, "residual add requires 'same' conv (padding=(K-1)//2)"

    # ---- fold BN (eval) into the pointwise*depthwise weights ----------------
    scale = gamma / jnp.sqrt(running_var + eps)           # (C,)
    shift = beta - running_mean * scale                   # (C,)
    # wfold[k, o, c] = scale[o] * pw[o, c] * dw[c, k]
    wfold = (scale[:, None] * pw_weight)[None, :, :] * dw_weight.T[:, None, :]
    # bf16 inputs -> bf16 MXU path (f32 accumulation in-kernel); f32 stays f32.
    wfold = wfold.astype(x.dtype if x.dtype == jnp.bfloat16 else jnp.float32)
    bias = shift.astype(jnp.float32).reshape(C, 1)

    # ---- pick a lane-dense time tile sized for VMEM --------------------------
    itemsize = x.dtype.itemsize
    if time_tile is None:
        budget = 16 * 1024 * 1024                  # double-buffered block budget
        per_col = 2 * 2 * C * itemsize             # (in + out) * double buffer
        tt = min(512, max(_LANE, (budget // per_col) // _LANE * _LANE))
        tt = min(tt, -(-T_out // _LANE) * _LANE)   # don't over-pad short seqs
    else:
        tt = time_tile
    assert tt % _LANE == 0
    n_t = -(-T_out // tt)

    # ---- single pad: conv 'same' pad + rounding T_out up to n_t * tt ---------
    # (also supplies the zero halo of the last tile and lets the residual be
    #  sliced out of the same streamed window, so x is read only once)
    total_len = n_t * tt + (K - 1)
    x_pad = jnp.pad(x, ((0, 0), (0, 0), (padding, total_len - T - padding)))

    # Right halo of each tile: first K-1 columns of the next tile.
    idx = jnp.arange(1, n_t + 1)[:, None] * tt + jnp.arange(K - 1)[None, :]
    halo = jnp.transpose(x_pad[:, :, idx], (0, 2, 1, 3))  # (B, n_t, C, K-1)

    # ---- explicit VMEM budget (v7x 64 MiB physical -> cap at 48 MiB) ---------
    block_bytes = 2 * (C * tt + C * (K - 1)) * itemsize   # input, double-buffered
    block_bytes += 2 * C * tt * itemsize                  # output, double-buffered
    block_bytes += (K * C * C + C) * 4                    # resident weights/bias
    vmem_limit = int(min(48 * 1024 * 1024,
                         max(32 * 1024 * 1024, 2 * block_bytes)))

    out_padded = pl.pallas_call(
        functools.partial(_residual_block_kernel, pad_left=padding),
        out_shape=jax.ShapeDtypeStruct((B, C, n_t * tt), x.dtype),
        grid_spec=pltpu.PrefetchScalarGridSpec(
            num_scalar_prefetch=0,
            grid=(B, n_t),
            in_specs=[
                pl.BlockSpec((None, C, tt), lambda b, t: (b, 0, t)),
                pl.BlockSpec((None, None, C, K - 1), lambda b, t: (b, t, 0, 0)),
                pl.BlockSpec((K, C, C), lambda b, t: (0, 0, 0)),
                pl.BlockSpec((C, 1), lambda b, t: (0, 0)),
            ],
            out_specs=pl.BlockSpec((None, C, tt), lambda b, t: (b, 0, t)),
        ),
        compiler_params=pltpu.CompilerParams(
            dimension_semantics=("parallel", "parallel"),
            vmem_limit_bytes=vmem_limit),
    )(x_pad, halo, wfold, bias)

    if n_t * tt != T_out:
        out_padded = out_padded[:, :, :T_out]
    return out_padded


def _reference(x, dw_weight, pw_weight, gamma, beta, running_mean,
               running_var, *, padding=1, eps=1e-5):
    """Pure-JAX reference of the PyTorch eval-mode forward."""
    B, C, T = x.shape
    K = dw_weight.shape[-1]
    x_p = jnp.pad(x, ((0, 0), (0, 0), (padding, padding)))
    T_out = T + 2 * padding - K + 1
    y = jnp.zeros((B, C, T_out), jnp.float32)
    for k in range(K):                                   # depthwise
        y = y + dw_weight[None, :, k:k + 1] * x_p[:, :, k:k + T_out]
    y = jnp.einsum("oc,bct->bot", pw_weight, y)          # pointwise
    scale = gamma / jnp.sqrt(running_var + eps)          # BatchNorm (eval)
    y = y * scale[None, :, None] + (beta - running_mean * scale)[None, :, None]
    y = jnp.maximum(y, 0.0)                              # ReLU (dropout = id)
    return x + y                                         # residual


if __name__ == "__main__":
    B, C, T, K, P = 2, 4, 16, 3, 1

    key = jax.random.PRNGKey(0)
    kx, kdw, kpw, kg, kb, km, kv = jax.random.split(key, 7)

    x = jax.random.normal(kx, (B, C, T), dtype=jnp.float32)
    # PyTorch depthwise weight (C,1,K) -> (C,K); pointwise (C,C,1) -> (C,C)
    dw_weight = jax.random.normal(kdw, (C, K), dtype=jnp.float32) * 0.1
    pw_weight = jax.random.normal(kpw, (C, C), dtype=jnp.float32) * 0.1
    gamma = 1.0 + 0.2 * jax.random.normal(kg, (C,), dtype=jnp.float32)
    beta = 0.1 * jax.random.normal(kb, (C,), dtype=jnp.float32)
    running_mean = 0.1 * jax.random.normal(km, (C,), dtype=jnp.float32)
    running_var = jax.random.uniform(kv, (C,), dtype=jnp.float32,
                                     minval=0.5, maxval=1.5)

    out = residual_block_forward(x, dw_weight, pw_weight, gamma, beta,
                                 running_mean, running_var, padding=P)
    out = jax.block_until_ready(out)

    ref = jax.block_until_ready(
        _reference(x, dw_weight, pw_weight, gamma, beta, running_mean,
                   running_var, padding=P))

    assert out.shape == (B, C, T), out.shape
    np.testing.assert_allclose(np.asarray(out), np.asarray(ref),
                               rtol=1e-4, atol=1e-4)

    print("KERNEL_OK")
</pallas_src>

<mosaic_0001>
module attributes {stable_mosaic.version = 11 : i64} {
  func.func @_residual_block_kernel(%arg0: i32, %arg1: i32, %arg2: memref<1x4x128xf32, #tpu.memory_space<vmem>>, %arg3: memref<1x1x4x2xf32, #tpu.memory_space<vmem>>, %arg4: memref<3x4x4xf32, #tpu.memory_space<vmem>>, %arg5: memref<4x1xf32, #tpu.memory_space<vmem>>, %arg6: memref<1x4x128xf32, #tpu.memory_space<vmem>>) attributes {dimension_semantics = [#tpu.dimension_semantics<parallel>, #tpu.dimension_semantics<parallel>], iteration_bounds = array<i64: 2, 1>, scalar_prefetch = 0 : i64, scratch_operands = 0 : i64, tpu.core_type = #tpu.core_type<tc>, window_params = [{transform_indices = @transform_0, window_bounds = array<i64: 1, 4, 128>}, {transform_indices = @transform_1, window_bounds = array<i64: 1, 1, 4, 2>}, {pipeline_mode = #tpu.pipeline_mode<synchronous>, transform_indices = @transform_2, window_bounds = array<i64: 3, 4, 4>}, {pipeline_mode = #tpu.pipeline_mode<synchronous>, transform_indices = @transform_3, window_bounds = array<i64: 4, 1>}, {transform_indices = @transform_4, window_bounds = array<i64: 1, 4, 128>}]} {
    %c0 = arith.constant 0 : index
    %c0_0 = arith.constant 0 : index
    %c0_1 = arith.constant 0 : index
    %0 = vector.load %arg2[%c0, %c0_0, %c0_1] : memref<1x4x128xf32, #tpu.memory_space<vmem>>, vector<1x4x128xf32>
    %1 = vector.shape_cast %0 : vector<1x4x128xf32> to vector<4x128xf32>
    %c0_2 = arith.constant 0 : index
    %c0_3 = arith.constant 0 : index
    %c0_4 = arith.constant 0 : index
    %c0_5 = arith.constant 0 : index
    %2 = vector.load %arg3[%c0_2, %c0_3, %c0_4, %c0_5] : memref<1x1x4x2xf32, #tpu.memory_space<vmem>>, vector<1x1x4x2xf32>
    %3 = vector.shape_cast %2 : vector<1x1x4x2xf32> to vector<4x2xf32>
    %4 = tpu.concatenate %1, %3 in 1 : vector<4x128xf32>, vector<4x2xf32> -> vector<4x130xf32>
    %c0_6 = arith.constant 0 : index
    %c0_7 = arith.constant 0 : index
    %c0_8 = arith.constant 0 : index
    %5 = vector.load %arg4[%c0_6, %c0_7, %c0_8] : memref<3x4x4xf32, #tpu.memory_space<vmem>>, vector<1x4x4xf32>
    %6 = vector.shape_cast %5 : vector<1x4x4xf32> to vector<4x4xf32>
    %7 = vector.extract_strided_slice %4 {offsets = [0, 0], sizes = [4, 128], strides = [1, 1]} : vector<4x130xf32> to vector<4x128xf32>
    %cst = arith.constant dense<0.000000e+00> : vector<4x128xf32>
    %8 = tpu.matmul %6, %7, %cst {dimension_numbers = #tpu.dot_dimension_numbers<[1], [0], [0], [1], [0, 0, 1, 1], [], []>} : vector<4x4xf32>, vector<4x128xf32>, vector<4x128xf32> -> vector<4x128xf32>
    %c1 = arith.constant 1 : index
    %c0_9 = arith.constant 0 : index
    %c0_10 = arith.constant 0 : index
    %9 = vector.load %arg4[%c1, %c0_9, %c0_10] : memref<3x4x4xf32, #tpu.memory_space<vmem>>, vector<1x4x4xf32>
    %10 = vector.shape_cast %9 : vector<1x4x4xf32> to vector<4x4xf32>
    %11 = vector.extract_strided_slice %4 {offsets = [0, 1], sizes = [4, 128], strides = [1, 1]} : vector<4x130xf32> to vector<4x128xf32>
    %cst_11 = arith.constant dense<0.000000e+00> : vector<4x128xf32>
    %12 = tpu.matmul %10, %11, %cst_11 {dimension_numbers = #tpu.dot_dimension_numbers<[1], [0], [0], [1], [0, 0, 1, 1], [], []>} : vector<4x4xf32>, vector<4x128xf32>, vector<4x128xf32> -> vector<4x128xf32>
    %13 = arith.addf %8, %12 : vector<4x128xf32>
    %c2 = arith.constant 2 : index
    %c0_12 = arith.constant 0 : index
    %c0_13 = arith.constant 0 : index
    %14 = vector.load %arg4[%c2, %c0_12, %c0_13] : memref<3x4x4xf32, #tpu.memory_space<vmem>>, vector<1x4x4xf32>
    %15 = vector.shape_cast %14 : vector<1x4x4xf32> to vector<4x4xf32>
    %16 = vector.extract_strided_slice %4 {offsets = [0, 2], sizes = [4, 128], strides = [1, 1]} : vector<4x130xf32> to vector<4x128xf32>
    %cst_14 = arith.constant dense<0.000000e+00> : vector<4x128xf32>
    %17 = tpu.matmul %15, %16, %cst_14 {dimension_numbers = #tpu.dot_dimension_numbers<[1], [0], [0], [1], [0, 0, 1, 1], [], []>} : vector<4x4xf32>, vector<4x128xf32>, vector<4x128xf32> -> vector<4x128xf32>
    %18 = arith.addf %13, %17 : vector<4x128xf32>
    %c0_15 = arith.constant 0 : index
    %c0_16 = arith.constant 0 : index
    %19 = vector.load %arg5[%c0_15, %c0_16] : memref<4x1xf32, #tpu.memory_space<vmem>>, vector<4x1xf32>
    %20 = vector.broadcast %19 : vector<4x1xf32> to vector<4x128xf32>
    %21 = arith.addf %18, %20 : vector<4x128xf32>
    %cst_17 = arith.constant 0.000000e+00 : f32
    %22 = vector.broadcast %cst_17 : f32 to vector<4x128xf32>
    %23 = arith.maximumf %21, %22 : vector<4x128xf32>
    %24 = vector.extract_strided_slice %4 {offsets = [0, 1], sizes = [4, 128], strides = [1, 1]} : vector<4x130xf32> to vector<4x128xf32>
    %25 = arith.addf %24, %23 : vector<4x128xf32>
    %c0_18 = arith.constant 0 : index
    %c0_19 = arith.constant 0 : index
    %c0_20 = arith.constant 0 : index
    %26 = vector.load %arg6[%c0_18, %c0_19, %c0_20] : memref<1x4x128xf32, #tpu.memory_space<vmem>>, vector<1x4x128xf32>
    %27 = vector.shape_cast %26 : vector<1x4x128xf32> to vector<4x128xf32>
    %28 = vector.shape_cast %25 : vector<4x128xf32> to vector<1x4x128xf32>
    tpu.vector_store %arg6[%c0_18, %c0_19, %c0_20], %28 {strides = array<i32>} : memref<1x4x128xf32, #tpu.memory_space<vmem>>, vector<1x4x128xf32>,
    return
  }
  func.func @transform_0(%arg0: i32, %arg1: i32) -> (i32, i32, i32) {
    %c0_i32 = arith.constant 0 : i32
    %c0_i32_0 = arith.constant 0 : i32
    return %arg0, %c0_i32, %arg1 : i32, i32, i32
  }
  func.func @transform_1(%arg0: i32, %arg1: i32) -> (i32, i32, i32, i32) {
    %c0_i32 = arith.constant 0 : i32
    %c0_i32_0 = arith.constant 0 : i32
    %c0_i32_1 = arith.constant 0 : i32
    return %arg0, %arg1, %c0_i32, %c0_i32_0 : i32, i32, i32, i32
  }
  func.func @transform_2(%arg0: i32, %arg1: i32) -> (i32, i32, i32) {
    %c0_i32 = arith.constant 0 : i32
    %c0_i32_0 = arith.constant 0 : i32
    %c0_i32_1 = arith.constant 0 : i32
    %c0_i32_2 = arith.constant 0 : i32
    return %c0_i32, %c0_i32_0, %c0_i32_1 : i32, i32, i32
  }
  func.func @transform_3(%arg0: i32, %arg1: i32) -> (i32, i32) {
    %c0_i32 = arith.constant 0 : i32
    %c0_i32_0 = arith.constant 0 : i32
    %c0_i32_1 = arith.constant 0 : i32
    return %c0_i32, %c0_i32_0 : i32, i32
  }
  func.func @transform_4(%arg0: i32, %arg1: i32) -> (i32, i32, i32) {
    %c0_i32 = arith.constant 0 : i32
    %c0_i32_0 = arith.constant 0 : i32
    return %arg0, %c0_i32, %arg1 : i32, i32, i32
  }
}

</mosaic_0001>

<llo_original>
// kernel: tpu_custom_call.1
$region0: #{tpu_custom_call.1}
  #allocation0 [shape = 'u32[]', space=smem, size = 0x4, offset = 0x4, fixed_abs, tag = 'smem constant byte address 0x4 - core index']
  #allocation1 [shape = 'u32[144,128]{1,0:T(1,128)}', space=vmem, size = 0x12000, scoped, tag = 'internal scratch']
  %s0 = inlined_call_operand.vmem [shape: f32[2,4,130], index: 0, kind: input, shape index: {}]
  %s1 = inlined_call_operand.vmem [shape: f32[2,1,4,2], index: 1, kind: input, shape index: {}]
  %s2 = inlined_call_operand.hbm [shape: f32[3,4,4], index: 2, kind: input, shape index: {}]
  %s3 = inlined_call_operand.vmem [shape: f32[4,1], index: 3, kind: input, shape index: {}]
  %s4 = inlined_call_operand.hbm [shape: f32[2,4,128], index: 4, kind: output, shape index: {}]
  %s5 = sld [smem:[#allocation0]]
  $region53: #{tpu_custom_call.1} parent=0
    _
  %s7 = ssub.s32 1, %s5
  %s8 = scalar_select 0, %s7, %s5
  $region1: #{tpu_custom_call.1} parent=0
    #allocation2 [shape = 'u8[6144]{0}', space=vmem, size = 0x1800, scoped, tag = 'input window, operand 2, single buffered']
    #allocation3 [shape = 's32[2]{0}', space=sflag, size = 0x8, scoped, tag = 'scoped memory for tpu_custom_call.1']
    #allocation4 [shape = 's32[2]{0}', space=sflag, size = 0x8, scoped, tag = 'scoped memory for tpu_custom_call.1']
    #allocation5 [shape = 'u8[4096]{0}', space=vmem, size = 0x1000, scoped, tag = 'output window, operand 0']
    %9 = vsyncpa [#allocation3], 0
    %10 = vsyncpa [#allocation4], 0
    %s11 = scalar_lea.sflag [#allocation4], 1
    %12 = vsyncpa %s11, 0
    loop: start=0, step=1, limit=4
    $region2: #{tpu_custom_call.1} parent=1 // loop_pre_header
      _
    $region3: #{tpu_custom_call.1} parent=1 // loop_header
      %s14 = sphi 0, %s18
      %p15 = scmp.ge.s32.totalorder %s14, 4
      %s21 = sphi 0, %s33
      %s22 = sphi 0, %s29
      %s23 = sphi 0, %s21
      %s24 = sphi 0, %s22
      %s25 = sphi 0, %s23
      %s26 = sphi 0, %s24
      %s38 = sphi 0, %s40
      %s41 = sphi 0, %s38
      %s42 = sphi 0, %s41
      %s58 = sphi 0, %s42
      %s66 = sphi 0, %s68
      %s69 = sphi 0, %s66
      %s70 = sphi 0, %s69
      %s86 = sphi 0, %s70
      %s90 = sphi 0, %s90
      %s92 = sphi 0, %s90
      %s93 = sphi 0, %s92
      %s107 = sphi 0, %s93
      %s111 = sphi 0, %s111
      %s113 = sphi 0, %s111
      %s114 = sphi 0, %s113
      %s128 = sphi 0, %s114
      %s136 = sphi 0, %s138
      %s139 = sphi 0, %s136
      %s140 = sphi 0, %s139
      %s156 = sphi 0, %s140
    $region4: #{tpu_custom_call.1} parent=1 // loop_header_branch
      %17 = sbr.rel (%p15) target = $region8
    $region5: #{tpu_custom_call.1} parent=1 // loop_body
      %s19 = ssub.s32 %s14, 1
      %s20 = ssub.s32 %s14, 2
      %s27 = sadd.s32 1, %s22
      %p28 = scmp.ge.s32.totalorder %s27, 1
      %s29 = scalar_select %p28, 0, %s27
      %s30 = sadd.s32 1, %s21
      %s31 = scalar_select %p28, %s30, %s21
      %p32 = scmp.ge.s32.totalorder %s31, 2
      %s33 = scalar_select %p32, 0, %s31
      %s34 = ssub.s32 %s21, %s33
      %s35 = ssub.s32 %s22, %s29
      %s36 = sor.u32 %s34, %s35
      %p37 = scmp.eq.s32.totalorder %s36, 0
      %s39 = sadd.s32 %s38, 1
      %s40 = scalar_select %p37, %s38, %s39
      %p43 = pneg %p37
      %p44 = scmp.eq.s32.totalorder %s14, 1
      %p45 = por %p43, %p44
      %p46 = scmp.ne.s32.totalorder %s38, %s41
      %p47 = scmp.eq.s32.totalorder %s14, 0
      %p48 = por %p46, %p47
      %p49 = scmp.ne.s32.totalorder %s38, %s41
      %p50 = scmp.eq.s32.totalorder %s19, 1
      %p51 = por %p49, %p50
      %p52 = scmp.ne.s32.totalorder %s41, %s42
      %p53 = scmp.eq.s32.totalorder %s19, 0
      %p54 = por %p52, %p53
      %p55 = scmp.ne.s32.totalorder %s41, %s42
      %p56 = scmp.eq.s32.totalorder %s20, 1
      %p57 = por %p55, %p56
      %p59 = scmp.ne.s32.totalorder %s42, %s58
      %p60 = scmp.eq.s32.totalorder %s20, 0
      %p61 = por %p59, %p60
      %s62 = ssub.s32 %s21, %s33
      %s63 = ssub.s32 %s22, %s29
      %s64 = sor.u32 %s62, %s63
      %p65 = scmp.eq.s32.totalorder %s64, 0
      %s67 = sadd.s32 %s66, 1
      %s68 = scalar_select %p65, %s66, %s67
      %p71 = pneg %p65
      %p72 = scmp.eq.s32.totalorder %s14, 1
      %p73 = por %p71, %p72
      %p74 = scmp.ne.s32.totalorder %s66, %s69
      %p75 = scmp.eq.s32.totalorder %s14, 0
      %p76 = por %p74, %p75
      %p77 = scmp.ne.s32.totalorder %s66, %s69
      %p78 = scmp.eq.s32.totalorder %s19, 1
      %p79 = por %p77, %p78
      %p80 = scmp.ne.s32.totalorder %s69, %s70
      %p81 = scmp.eq.s32.totalorder %s19, 0
      %p82 = por %p80, %p81
      %p83 = scmp.ne.s32.totalorder %s69, %s70
      %p84 = scmp.eq.s32.totalorder %s20, 1
      %p85 = por %p83, %p84
      %p87 = scmp.ne.s32.totalorder %s70, %s86
      %p88 = scmp.eq.s32.totalorder %s20, 0
      %p89 = por %p87, %p88
      %s91 = sadd.s32 %s90, 1
      %p94 = scmp.eq.s32.totalorder %s14, 1
      %p95 = scmp.ne.s32.totalorder %s90, %s92
      %p96 = scmp.eq.s32.totalorder %s14, 0
      %p97 = por %p95, %p96
      %p98 = scmp.ne.s32.totalorder %s90, %s92
      %p99 = scmp.eq.s32.totalorder %s19, 1
      %p100 = por %p98, %p99
      %p101 = scmp.ne.s32.totalorder %s92, %s93
      %p102 = scmp.eq.s32.totalorder %s19, 0
      %p103 = por %p101, %p102
      %p104 = scmp.ne.s32.totalorder %s92, %s93
      %p105 = scmp.eq.s32.totalorder %s20, 1
      %p106 = por %p104, %p105
      %p108 = scmp.ne.s32.totalorder %s93, %s107
      %p109 = scmp.eq.s32.totalorder %s20, 0
      %p110 = por %p108, %p109
      %s112 = sadd.s32 %s111, 1
      %p115 = scmp.eq.s32.totalorder %s14, 1
      %p116 = scmp.ne.s32.totalorder %s111, %s113
      %p117 = scmp.eq.s32.totalorder %s14, 0
      %p118 = por %p116, %p117
      %p119 = scmp.ne.s32.totalorder %s111, %s113
      %p120 = scmp.eq.s32.totalorder %s19, 1
      %p121 = por %p119, %p120
      %p122 = scmp.ne.s32.totalorder %s113, %s114
      %p123 = scmp.eq.s32.totalorder %s19, 0
      %p124 = por %p122, %p123
      %p125 = scmp.ne.s32.totalorder %s113, %s114
      %p126 = scmp.eq.s32.totalorder %s20, 1
      %p127 = por %p125, %p126
      %p129 = scmp.ne.s32.totalorder %s114, %s128
      %p130 = scmp.eq.s32.totalorder %s20, 0
      %p131 = por %p129, %p130
      %s132 = ssub.s32 %s21, %s33
      %s133 = ssub.s32 %s22, %s29
      %s134 = sor.u32 %s132, %s133
      %p135 = scmp.eq.s32.totalorder %s134, 0
      %s137 = sadd.s32 %s136, 1
      %s138 = scalar_select %p135, %s136, %s137
      %p141 = pneg %p135
      %p142 = scmp.eq.s32.totalorder %s14, 1
      %p143 = por %p141, %p142
      %p144 = scmp.ne.s32.totalorder %s136, %s139
      %p145 = scmp.eq.s32.totalorder %s14, 0
      %p146 = por %p144, %p145
      %p147 = scmp.ne.s32.totalorder %s136, %s139
      %p148 = scmp.eq.s32.totalorder %s19, 1
      %p149 = por %p147, %p148
      %p150 = scmp.ne.s32.totalorder %s139, %s140
      %p151 = scmp.eq.s32.totalorder %s19, 0
      %p152 = por %p150, %p151
      %p153 = scmp.ne.s32.totalorder %s139, %s140
      %p154 = scmp.eq.s32.totalorder %s20, 1
      %p155 = por %p153, %p154
      %p157 = scmp.ne.s32.totalorder %s140, %s156
      %p158 = scmp.eq.s32.totalorder %s20, 0
      %p159 = por %p157, %p158
      %p160 = scmp.le.s32.totalorder 1, %s14
      %p161 = scmp.lt.s32.totalorder %s14, 3
      %p162 = pnand %p160, %p161
      %p163 = pneg %p162
      // Predicated region
      $region9: #{tpu_custom_call.1} parent=5 // pred_check
        _
      $region10: #{tpu_custom_call.1} parent=5 // pred_check_branch
        %165 = sbr.rel (%p162) target = $region12
      $region11: #{tpu_custom_call.1} parent=5 // pred_region
        %s166 = ssub.s32 %s14, 1
        // Predicated region
        $region13: #{tpu_custom_call.1} parent=11 // pred_check
          %p167 = pneg %p103
        $region14: #{tpu_custom_call.1} parent=11 // pred_check_branch
          %169 = sbr.rel (%p167) target = $region16
        $region15: #{tpu_custom_call.1} parent=11 // pred_region
          %s171 = ssub.s32 192, 192
          %172 = vsyncadd [#allocation3], %s171
          %s173 = sshll.u32 [#allocation2], 4
          %s174 = int_to_ptr.vmem [resolvable:$true] %s173
          %179 = dma.hbm_to_vmem [thread:$0]  %s2, 192, %s174, [#allocation3], 64, 64, 4
        $region16: #{tpu_custom_call.1} parent=11 // pred_fallthru
          _
        // Predicated region
        $region17: #{tpu_custom_call.1} parent=11 // pred_check
          %p180 = pneg %p124
        $region18: #{tpu_custom_call.1} parent=11 // pred_check_branch
          %182 = sbr.rel (%p180) target = $region20
        $region19: #{tpu_custom_call.1} parent=11 // pred_region
          _
        $region20: #{tpu_custom_call.1} parent=11 // pred_fallthru
          _
      $region12: #{tpu_custom_call.1} parent=5 // pred_fallthru
        _
      %p183 = scmp.lt.s32.totalorder %s14, 2
      // Predicated region
      $region21: #{tpu_custom_call.1} parent=5 // pred_check
        %p184 = pneg %p183
      $region22: #{tpu_custom_call.1} parent=5 // pred_check_branch
        %186 = sbr.rel (%p184) target = $region24
      $region23: #{tpu_custom_call.1} parent=5 // pred_region
        // Predicated region
        $region25: #{tpu_custom_call.1} parent=23 // pred_check
          %p187 = pneg %p48
        $region26: #{tpu_custom_call.1} parent=23 // pred_check_branch
          %189 = sbr.rel (%p187) target = $region28
        $region27: #{tpu_custom_call.1} parent=23 // pred_region
          %p190 = scmp.lt.s32.totalorder %s21, 1
          %s191 = scalar_select %p190, %s21, 1
          %p192 = scmp.lt.s32.totalorder %s22, 1
          %s193 = scalar_select %p192, %s22, 1
          %s194 = smul.addr %s191, 2
          %s195 = sadd.s32 %s193, %s194
          %s196 = smul.addr %s195, 4
          %s197 = scalar_lea.vmem %s0, %s196
        $region28: #{tpu_custom_call.1} parent=23 // pred_fallthru
          _
        // Predicated region
        $region29: #{tpu_custom_call.1} parent=23 // pred_check
          %p198 = pneg %p76
        $region30: #{tpu_custom_call.1} parent=23 // pred_check_branch
          %200 = sbr.rel (%p198) target = $region32
        $region31: #{tpu_custom_call.1} parent=23 // pred_region
          %p201 = scmp.lt.s32.totalorder %s21, 1
          %s202 = scalar_select %p201, %s21, 1
          %p203 = scmp.lt.s32.totalorder %s22, 0
          %s204 = scalar_select %p203, %s22, 0
          %s205 = sadd.s32 %s204, %s202
          %s206 = smul.addr %s205, 4
          %s207 = scalar_lea.vmem %s1, %s206
        $region32: #{tpu_custom_call.1} parent=23 // pred_fallthru
          _
      $region24: #{tpu_custom_call.1} parent=5 // pred_fallthru
        _
      %p208 = scmp.le.s32.totalorder 1, %s14
      %p209 = scmp.lt.s32.totalorder %s14, 3
      %p210 = pnand %p208, %p209
      %p211 = pneg %p210
      // Predicated region
      $region33: #{tpu_custom_call.1} parent=5 // pred_check
        _
      $region34: #{tpu_custom_call.1} parent=5 // pred_check_branch
        %213 = sbr.rel (%p210) target = $region36
      $region35: #{tpu_custom_call.1} parent=5 // pred_region
        %s214 = ssub.s32 %s14, 1
        // Predicated region
        $region37: #{tpu_custom_call.1} parent=35 // pred_check
          %p215 = pneg %p103
        $region38: #{tpu_custom_call.1} parent=35 // pred_check_branch
          %217 = sbr.rel (%p215) target = $region40
        $region39: #{tpu_custom_call.1} parent=35 // pred_region
          %218 = dma.done [#allocation3], 192
        $region40: #{tpu_custom_call.1} parent=35 // pred_fallthru
          _
        %p219 = scmp.lt.s32.totalorder %s23, 1
        %s220 = scalar_select %p219, %s23, 1
        %p221 = scmp.lt.s32.totalorder %s24, 1
        %s222 = scalar_select %p221, %s24, 1
        %s223 = smul.addr %s220, 2
        %s224 = sadd.s32 %s222, %s223
        %s225 = smul.addr %s224, 4
        %s226 = scalar_lea.vmem %s0, %s225
        %p227 = pneg %p54
        %p228 = pneg %p51
        %p229 = scmp.lt.s32.totalorder %s23, 1
        %s230 = scalar_select %p229, %s23, 1
        %p231 = scmp.lt.s32.totalorder %s24, 0
        %s232 = scalar_select %p231, %s24, 0
        %s233 = sadd.s32 %s232, %s230
        %s234 = smul.addr %s233, 4
        %s235 = scalar_lea.vmem %s1, %s234
        %p236 = pneg %p82
        %p237 = pneg %p79
        %p238 = pneg %p103
        %p239 = pneg %p100
        %p240 = pneg %p124
        %p241 = pneg %p121
        %p242 = pneg %p152
        %p243 = pneg %p149
        %s244 = sand.u32 %s139, 1
        %s245 = scalar_lea.sflag [#allocation4], %s244
        %s246 = sand.u32 %s139, 1
        %s247 = smul.addr %s246, 4
        %s248 = scalar_lea.vmem [#allocation5], %s247
        %p249 = scmp.lt.s32.totalorder %s23, 1
        %s250 = scalar_select %p249, %s23, 1
        %p251 = scmp.lt.s32.totalorder %s24, 1
        %s252 = scalar_select %p251, %s24, 1
        %s253 = smul.addr %s250, 2
        %s254 = sadd.s32 %s252, %s253
        %s255 = smul.addr %s254, 4
        %s256 = scalar_lea.vmem %s0, %s255
        %p257 = scmp.lt.s32.totalorder %s23, 1
        %s258 = scalar_select %p257, %s23, 1
        %p259 = scmp.lt.s32.totalorder %s24, 0
        %s260 = scalar_select %p259, %s24, 0
        %s261 = sadd.s32 %s260, %s258
        %s262 = smul.addr %s261, 4
        %s263 = scalar_lea.vmem %s1, %s262
        %v264 = vld [vmem:[%s256] sm:$0xf]
        %v265 = vld [vmem:[%s263] sm:$0xf]
        %v266 = vld [vmem:[#allocation2] sm:$0xf]
        %s267 = scalar_lea.vmem [#allocation2], 4
        %v268 = vld [vmem:[%s267] sm:$0xf]
        %271 = vrot.lane.b32.xlu0 %v264, 127
        %v272 = vpop.permute.xlu0 %271
        %273 = vrot.lane.b32.xlu0 %v265, 127
        %v274 = vpop.permute.xlu0 %273
        %vm275 = vcmask 1039360
        %v276 = vsel %vm275, %v272, %v274
        %vm277 = vcmask 31744
        %v279 = vsel %vm277, %v268, 0
        %vm281 = vcmask 1043456
        %v282 = vsel %vm281, %v276, 0
        %284 = vmatprep.subr.mxu0 0.0
        %285 = vmatpush1.msra.mxu0 %v282
        %286 = vmatprep.subr.mxu0 0.0
        %287 = vmatpush1.msra.mxu0 0.0
        %288 = vmatprep.subr.mxu0 0.0
        %289 = vmatpush1.msra.mxu0 0.0
        %290 = vmatprep.subr.mxu0 0.0
        %291 = vmatpush1.msra.mxu0 0.0
        %292 = vmatprep.subr.mxu0 0.0
        %293 = vmatpush1.msra.mxu0 0.0
        %294 = vmatprep.subr.mxu0 0.0
        %295 = vmatpush1.msra.mxu0 0.0
        %296 = vmatprep.subr.mxu0 0.0
        %297 = vmatpush1.msra.mxu0 0.0
        %298 = vmatprep.subr.mxu0 0.0
        %299 = vmatpush1.msra.mxu0 0.0
        %300 = vmatprep.subr.mxu0 0.0
        %301 = vmatpush1.msra.mxu0 0.0
        %302 = vmatprep.subr.mxu0 0.0
        %303 = vmatpush1.msra.mxu0 0.0
        %304 = vmatprep.subr.mxu0 0.0
        %305 = vmatpush1.msra.mxu0 0.0
        %306 = vmatprep.subr.mxu0 0.0
        %307 = vmatpush1.msra.mxu0 0.0
        %308 = vmatprep.subr.mxu0 0.0
        %309 = vmatpush1.msra.mxu0 0.0
        %310 = vmatprep.subr.mxu0 0.0
        %311 = vmatpush1.msra.mxu0 0.0
        %312 = vmatprep.subr.mxu0 0.0
        %313 = vmatpush1.msra.mxu0 0.0
        %314 = vmatprep.subr.mxu0 0.0
        %315 = vmatpush1.msra.mxu0 0.0
        %316 = vmatprep.subr.mxu0 0.0
        %317 = vmatpush1.msra.mxu0 0.0
        %318 = vmatprep.subr.mxu0 0.0
        %319 = vmatpush1.msra.mxu0 0.0
        %320 = vmatprep.subr.mxu0 0.0
        %321 = vmatpush1.msra.mxu0 0.0
        %322 = vmatprep.subr.mxu0 0.0
        %323 = vmatpush1.msra.mxu0 0.0
        %324 = vmatprep.subr.mxu0 0.0
        %325 = vmatpush1.msra.mxu0 0.0
        %326 = vmatprep.subr.mxu0 0.0
        %327 = vmatpush1.msra.mxu0 0.0
        %328 = vmatprep.subr.mxu0 0.0
        %329 = vmatpush1.msra.mxu0 0.0
        %330 = vmatprep.subr.mxu0 0.0
        %331 = vmatpush1.msra.mxu0 0.0
        %332 = vmatprep.subr.mxu0 0.0
        %333 = vmatpush1.msra.mxu0 0.0
        %334 = vmatprep.subr.mxu0 0.0
        %335 = vmatpush1.msra.mxu0 0.0
        %336 = vmatprep.subr.mxu0 0.0
        %337 = vmatpush1.msra.mxu0 0.0
        %338 = vmatprep.subr.mxu0 0.0
        %339 = vmatpush1.msra.mxu0 0.0
        %340 = vmatprep.subr.mxu0 0.0
        %341 = vmatpush1.msra.mxu0 0.0
        %342 = vmatprep.subr.mxu0 0.0
        %343 = vmatpush1.msra.mxu0 0.0
        %344 = vmatprep.subr.mxu0 0.0
        %345 = vmatpush1.msra.mxu0 0.0
        %346 = vmatprep.subr.mxu0 0.0
        %347 = vmatpush1.msra.mxu0 0.0
        %348 = vmatprep.mubr.f32.mxu0 0.0
        %349 = vmatmul.mubr.f32.gmra.mrb[0].mxu0 %v279
        %v350 = vpop.f32.mrb[0].mxu0
        %v351 = vadd.f32 0.0, %v350
        %v352 = vpop.f32.mrb[0].mxu0
        %353 = vdwg.mxu0
        %v355 = vsel %vm277, %v266, 0
        %v357 = vsel %vm281, %v264, 0
        %359 = vmatprep.subr.mxu0 0.0
        %360 = vmatpush1.msra.mxu0 %v357
        %361 = vmatprep.subr.mxu0 0.0
        %362 = vmatpush1.msra.mxu0 0.0
        %363 = vmatprep.subr.mxu0 0.0
        %364 = vmatpush1.msra.mxu0 0.0
        %365 = vmatprep.subr.mxu0 0.0
        %366 = vmatpush1.msra.mxu0 0.0
        %367 = vmatprep.subr.mxu0 0.0
        %368 = vmatpush1.msra.mxu0 0.0
        %369 = vmatprep.subr.mxu0 0.0
        %370 = vmatpush1.msra.mxu0 0.0
        %371 = vmatprep.subr.mxu0 0.0
        %372 = vmatpush1.msra.mxu0 0.0
        %373 = vmatprep.subr.mxu0 0.0
        %374 = vmatpush1.msra.mxu0 0.0
        %375 = vmatprep.subr.mxu0 0.0
        %376 = vmatpush1.msra.mxu0 0.0
        %377 = vmatprep.subr.mxu0 0.0
        %378 = vmatpush1.msra.mxu0 0.0
        %379 = vmatprep.subr.mxu0 0.0
        %380 = vmatpush1.msra.mxu0 0.0
        %381 = vmatprep.subr.mxu0 0.0
        %382 = vmatpush1.msra.mxu0 0.0
        %383 = vmatprep.subr.mxu0 0.0
        %384 = vmatpush1.msra.mxu0 0.0
        %385 = vmatprep.subr.mxu0 0.0
        %386 = vmatpush1.msra.mxu0 0.0
        %387 = vmatprep.subr.mxu0 0.0
        %388 = vmatpush1.msra.mxu0 0.0
        %389 = vmatprep.subr.mxu0 0.0
        %390 = vmatpush1.msra.mxu0 0.0
        %391 = vmatprep.subr.mxu0 0.0
        %392 = vmatpush1.msra.mxu0 0.0
        %393 = vmatprep.subr.mxu0 0.0
        %394 = vmatpush1.msra.mxu0 0.0
        %395 = vmatprep.subr.mxu0 0.0
        %396 = vmatpush1.msra.mxu0 0.0
        %397 = vmatprep.subr.mxu0 0.0
        %398 = vmatpush1.msra.mxu0 0.0
        %399 = vmatprep.subr.mxu0 0.0
        %400 = vmatpush1.msra.mxu0 0.0
        %401 = vmatprep.subr.mxu0 0.0
        %402 = vmatpush1.msra.mxu0 0.0
        %403 = vmatprep.subr.mxu0 0.0
        %404 = vmatpush1.msra.mxu0 0.0
        %405 = vmatprep.subr.mxu0 0.0
        %406 = vmatpush1.msra.mxu0 0.0
        %407 = vmatprep.subr.mxu0 0.0
        %408 = vmatpush1.msra.mxu0 0.0
        %409 = vmatprep.subr.mxu0 0.0
        %410 = vmatpush1.msra.mxu0 0.0
        %411 = vmatprep.subr.mxu0 0.0
        %412 = vmatpush1.msra.mxu0 0.0
        %413 = vmatprep.subr.mxu0 0.0
        %414 = vmatpush1.msra.mxu0 0.0
        %415 = vmatprep.subr.mxu0 0.0
        %416 = vmatpush1.msra.mxu0 0.0
        %417 = vmatprep.subr.mxu0 0.0
        %418 = vmatpush1.msra.mxu0 0.0
        %419 = vmatprep.subr.mxu0 0.0
        %420 = vmatpush1.msra.mxu0 0.0
        %421 = vmatprep.subr.mxu0 0.0
        %422 = vmatpush1.msra.mxu0 0.0
        %423 = vmatprep.mubr.f32.mxu0 0.0
        %424 = vmatmul.mubr.f32.gmra.mrb[0].mxu0 %v355
        %v425 = vpop.f32.mrb[0].mxu0
        %v426 = vadd.f32 %v351, %v425
        %v427 = vpop.f32.mrb[0].mxu0
        %428 = vdwg.mxu0
        %s429 = scalar_lea.vmem [#allocation2], 8
        %v430 = vld [vmem:[%s429] sm:$0xf]
        %431 = vrot.lane.b32.xlu0 %v264, 126
        %v432 = vpop.permute.xlu0 %431
        %433 = vrot.lane.b32.xlu0 %v265, 126
        %v434 = vpop.permute.xlu0 %433
        %vm435 = vcmask 1031168
        %v436 = vsel %vm435, %v432, %v434
        %v438 = vsel %vm277, %v430, 0
        %v440 = vsel %vm281, %v436, 0
        %442 = vmatprep.subr.mxu0 0.0
        %443 = vmatpush1.msra.mxu0 %v440
        %444 = vmatprep.subr.mxu0 0.0
        %445 = vmatpush1.msra.mxu0 0.0
        %446 = vmatprep.subr.mxu0 0.0
        %447 = vmatpush1.msra.mxu0 0.0
        %448 = vmatprep.subr.mxu0 0.0
        %449 = vmatpush1.msra.mxu0 0.0
        %450 = vmatprep.subr.mxu0 0.0
        %451 = vmatpush1.msra.mxu0 0.0
        %452 = vmatprep.subr.mxu0 0.0
        %453 = vmatpush1.msra.mxu0 0.0
        %454 = vmatprep.subr.mxu0 0.0
        %455 = vmatpush1.msra.mxu0 0.0
        %456 = vmatprep.subr.mxu0 0.0
        %457 = vmatpush1.msra.mxu0 0.0
        %458 = vmatprep.subr.mxu0 0.0
        %459 = vmatpush1.msra.mxu0 0.0
        %460 = vmatprep.subr.mxu0 0.0
        %461 = vmatpush1.msra.mxu0 0.0
        %462 = vmatprep.subr.mxu0 0.0
        %463 = vmatpush1.msra.mxu0 0.0
        %464 = vmatprep.subr.mxu0 0.0
        %465 = vmatpush1.msra.mxu0 0.0
        %466 = vmatprep.subr.mxu0 0.0
        %467 = vmatpush1.msra.mxu0 0.0
        %468 = vmatprep.subr.mxu0 0.0
        %469 = vmatpush1.msra.mxu0 0.0
        %470 = vmatprep.subr.mxu0 0.0
        %471 = vmatpush1.msra.mxu0 0.0
        %472 = vmatprep.subr.mxu0 0.0
        %473 = vmatpush1.msra.mxu0 0.0
        %474 = vmatprep.subr.mxu0 0.0
        %475 = vmatpush1.msra.mxu0 0.0
        %476 = vmatprep.subr.mxu0 0.0
        %477 = vmatpush1.msra.mxu0 0.0
        %478 = vmatprep.subr.mxu0 0.0
        %479 = vmatpush1.msra.mxu0 0.0
        %480 = vmatprep.subr.mxu0 0.0
        %481 = vmatpush1.msra.mxu0 0.0
        %482 = vmatprep.subr.mxu0 0.0
        %483 = vmatpush1.msra.mxu0 0.0
        %484 = vmatprep.subr.mxu0 0.0
        %485 = vmatpush1.msra.mxu0 0.0
        %486 = vmatprep.subr.mxu0 0.0
        %487 = vmatpush1.msra.mxu0 0.0
        %488 = vmatprep.subr.mxu0 0.0
        %489 = vmatpush1.msra.mxu0 0.0
        %490 = vmatprep.subr.mxu0 0.0
        %491 = vmatpush1.msra.mxu0 0.0
        %492 = vmatprep.subr.mxu0 0.0
        %493 = vmatpush1.msra.mxu0 0.0
        %494 = vmatprep.subr.mxu0 0.0
        %495 = vmatpush1.msra.mxu0 0.0
        %496 = vmatprep.subr.mxu0 0.0
        %497 = vmatpush1.msra.mxu0 0.0
        %498 = vmatprep.subr.mxu0 0.0
        %499 = vmatpush1.msra.mxu0 0.0
        %500 = vmatprep.subr.mxu0 0.0
        %501 = vmatpush1.msra.mxu0 0.0
        %502 = vmatprep.subr.mxu0 0.0
        %503 = vmatpush1.msra.mxu0 0.0
        %504 = vmatprep.subr.mxu0 0.0
        %505 = vmatpush1.msra.mxu0 0.0
        %506 = vmatprep.mubr.f32.mxu0 0.0
        %507 = vmatmul.mubr.f32.gmra.mrb[0].mxu0 %v438
        %v508 = vpop.f32.mrb[0].mxu0
        %v509 = vadd.f32 0.0, %v508
        %v510 = vpop.f32.mrb[0].mxu0
        %511 = vdwg.mxu0
        %v512 = vadd.f32 %v426, %v509
        %v513 = vld [vmem:[%s3] sm:$0xf]
        %515 = vset.pattern.permute.xlu0 0
        %516 = vperm.xlu0 %515, %v513
        %v517 = vpop.permute.xlu0 %516
        %v519 = vadd.f32 %v512, %v517
        %v520 = vmax.f32 %v519, 0.0
        %522 = vrot.lane.b32.xlu0 %v520, 1
        %v523 = vpop.permute.xlu0 %522
        %v525 = vadd.f32 %v264, %v523
        %v526 = vadd.f32 %v265, %v523
        %529 = vrot.lane.b32.xlu0 %v525, 127
        %v530 = vpop.permute.xlu0 %529
        %531 = vrot.lane.b32.xlu0 %v526, 127
        %v532 = vpop.permute.xlu0 %531
        %v533 = vsel %vm275, %v530, %v532
        %535 = vst [vmem:[%s248] sm:$0xf] %v533
        %s536 = sand.u32 %s139, 1
        %s537 = scalar_lea.sflag [#allocation4], %s536
        %s538 = sand.u32 %s139, 1
        %s539 = smul.addr %s538, 4
        %s540 = scalar_lea.vmem [#allocation5], %s539
        // Predicated region
        $region41: #{tpu_custom_call.1} parent=35 // pred_check
          %p541 = pneg %p149
        $region42: #{tpu_custom_call.1} parent=35 // pred_check_branch
          %543 = sbr.rel (%p541) target = $region44
        $region43: #{tpu_custom_call.1} parent=35 // pred_region
          %s545 = ssub.s32 64, 64
          %546 = vsyncadd %s537, %s545
          %s547 = sadd.s32 %s24, %s23
          %s548 = smul.addr %s547, 64
          %s549 = scalar_lea.hbm %s4, %s548
          %s551 = sshll.u32 %s540, 4
          %s552 = int_to_ptr.vmem [resolvable:$true] %s551
          %554 = dma.vmem_to_hbm [thread:$0]  %s552, 64, %s549, %s537
        $region44: #{tpu_custom_call.1} parent=35 // pred_fallthru
          _
      $region36: #{tpu_custom_call.1} parent=5 // pred_fallthru
        _
      %p555 = scmp.le.s32.totalorder 2, %s14
      // Predicated region
      $region45: #{tpu_custom_call.1} parent=5 // pred_check
        %p556 = pneg %p555
      $region46: #{tpu_custom_call.1} parent=5 // pred_check_branch
        %558 = sbr.rel (%p556) target = $region48
      $region47: #{tpu_custom_call.1} parent=5 // pred_region
        %s559 = ssub.s32 %s14, 2
        // Predicated region
        $region49: #{tpu_custom_call.1} parent=47 // pred_check
          %p560 = pneg %p155
        $region50: #{tpu_custom_call.1} parent=47 // pred_check_branch
          %562 = sbr.rel (%p560) target = $region52
        $region51: #{tpu_custom_call.1} parent=47 // pred_region
          %s563 = sand.u32 %s140, 1
          %s564 = scalar_lea.sflag [#allocation4], %s563
          %s565 = sand.u32 %s140, 1
          %s566 = smul.addr %s565, 4
          %s567 = scalar_lea.vmem [#allocation5], %s566
          %568 = dma.done %s564, 64
        $region52: #{tpu_custom_call.1} parent=47 // pred_fallthru
          _
      $region48: #{tpu_custom_call.1} parent=5 // pred_fallthru
        _
    $region6: #{tpu_custom_call.1} parent=1 // loop_footer
      %s18 = sadd.s32 1, %s14
    $region7: #{tpu_custom_call.1} parent=1 // loop_footer_branch
      %13 = sbr.rel target = $region3
    $region8: #{tpu_custom_call.1} parent=1 // loop_exit
      _
    %569 = vsyncpa [#allocation3], 1
    %s570 = scalar_lea.sflag [#allocation3], 1
    %571 = vsyncpa %s570, 1
    %572 = vsyncpa [#allocation4], 1
    %s573 = scalar_lea.sflag [#allocation4], 1
    %574 = vsyncpa %s573, 1

</llo_original>
